<compile_context>
chip_gen: v6e
topology: v6e:2x2x1
jax: 0.10.0
libtpu: 0.0.40
codegen_flags: <defaults>
</compile_context>

<pallas_src>
import jax
import jax.numpy as jnp
from jax.experimental import pallas as pl
from jax.experimental.pallas import tpu as pltpu

_LANE = 128
_SUBLANE_BF16 = 16  # bf16 packs [16, 128] per vreg


def _round_up(n, m):
    return ((n + m - 1) // m) * m


def _cdiv(a, b):
    return -(-a // b)


def _mlp_kernel(x_ref, w1_ref, b1_ref, w2_ref, b2_ref,
                w3_ref, b3_ref, w4_ref, b4_ref, o_ref):
    # encoder: Linear -> ReLU -> Linear -> ReLU (bf16 MXU, f32 accumulate/VPU)
    h1 = jnp.dot(x_ref[...], w1_ref[...], preferred_element_type=jnp.float32)
    h1 = jnp.maximum(h1 + b1_ref[...], 0.0)
    z = jnp.dot(h1.astype(jnp.bfloat16), w2_ref[...],
                preferred_element_type=jnp.float32)
    z = jnp.maximum(z + b2_ref[...], 0.0)                      # encoded_features
    # disease_classifier: Linear -> ReLU -> Linear -> Sigmoid
    h2 = jnp.dot(z.astype(jnp.bfloat16), w3_ref[...],
                 preferred_element_type=jnp.float32)
    h2 = jnp.maximum(h2 + b3_ref[...], 0.0)
    logits = jnp.dot(h2.astype(jnp.bfloat16), w4_ref[...],
                     preferred_element_type=jnp.float32) + b4_ref[...]
    o_ref[...] = jax.nn.sigmoid(logits).astype(o_ref.dtype)    # predictions


def prepare_params(params):
    """Pad feature dims to lane multiples and cast weights to bf16 ONCE.

    Call this a single time at init and reuse the result across forward calls
    (avoids re-running 8 pad+cast XLA ops over the weights every forward).
    """
    w1, b1, w2, b2, w3, b3, w4, b4 = params
    d_in, h1 = w1.shape
    latent, h2, d_out = w2.shape[1], w3.shape[1], w4.shape[1]

    dp = _round_up(d_in, _LANE)
    h1p = _round_up(h1, _LANE)
    lp = _round_up(latent, _LANE)
    h2p = _round_up(h2, _LANE)
    # Keep the output narrow: only pad d_out to 8 lanes.  The block's last dim
    # equals the full array's last dim, so it is a legal BlockSpec, and the
    # f32 writeback shrinks ~16x vs a 128-lane pad (the kernel is HBM-bound).
    op = _round_up(d_out, 8)

    def pad2(a, rows, cols, dtype):
        return jnp.pad(a, ((0, rows - a.shape[0]), (0, cols - a.shape[1]))).astype(dtype)

    return dict(
        w1=pad2(w1, dp, h1p, jnp.bfloat16), b1=pad2(b1, 1, h1p, jnp.float32),
        w2=pad2(w2, h1p, lp, jnp.bfloat16), b2=pad2(b2, 1, lp, jnp.float32),
        w3=pad2(w3, lp, h2p, jnp.bfloat16), b3=pad2(b3, 1, h2p, jnp.float32),
        w4=pad2(w4, h2p, op, jnp.bfloat16), b4=pad2(b4, 1, op, jnp.float32),
        d_in=d_in, d_out=d_out, dp=dp, h1p=h1p, lp=lp, h2p=h2p, op=op,
    )


def model_wrapper_forward(x, prepared, *, batch_tile=1024):
    """encoder + disease_classifier fused into one batch-tiled Pallas kernel."""
    B, d_in = x.shape
    assert d_in == prepared["d_in"]
    d_out = prepared["d_out"]
    dp, h1p, lp, h2p, op = (prepared[k] for k in ("dp", "h1p", "lp", "h2p", "op"))

    # Batch tiling:
    #   * multiples of 16 rows (bf16 sublane packing),
    #   * >=2 "parallel" tiles when B is large enough so both v7x TensorCores
    #     get work (no-op on single-TC v5e/v6e),
    #   * tile chosen from n_tiles so over-padding stays <16 rows per tile
    #     (no huge dead-batch pad when B isn't a multiple of a 1K tile).
    bp16 = _round_up(B, _SUBLANE_BF16)
    n_tiles = max(1, _cdiv(bp16, batch_tile))
    if bp16 > _SUBLANE_BF16:
        n_tiles = max(n_tiles, 2)
    tb = _round_up(_cdiv(bp16, n_tiles), _SUBLANE_BF16)
    bp = tb * n_tiles

    xp = jnp.pad(x, ((0, bp - B), (0, dp - d_in))).astype(jnp.bfloat16)
    w1p, b1p = prepared["w1"], prepared["b1"]
    w2p, b2p = prepared["w2"], prepared["b2"]
    w3p, b3p = prepared["w3"], prepared["b3"]
    w4p, b4p = prepared["w4"], prepared["b4"]

    # Weights/biases: same block for every grid step -> stay resident in VMEM.
    resident = lambda a: pl.BlockSpec(a.shape, lambda i: (0, 0))

    flops = 2 * bp * (dp * h1p + h1p * lp + lp * h2p + h2p * op)
    bytes_accessed = (
        sum(int(a.size) * a.dtype.itemsize
            for a in (xp, w1p, b1p, w2p, b2p, w3p, b3p, w4p, b4p))
        + bp * op * 4)

    out = pl.pallas_call(
        _mlp_kernel,
        out_shape=jax.ShapeDtypeStruct((bp, op), jnp.float32),
        grid_spec=pltpu.PrefetchScalarGridSpec(
            num_scalar_prefetch=0,
            grid=(n_tiles,),
            in_specs=[
                pl.BlockSpec((tb, dp), lambda i: (i, 0)),   # x tiled over batch
                resident(w1p), resident(b1p),
                resident(w2p), resident(b2p),
                resident(w3p), resident(b3p),
                resident(w4p), resident(b4p),
            ],
            out_specs=pl.BlockSpec((tb, op), lambda i: (i, 0)),
        ),
        compiler_params=pltpu.CompilerParams(
            dimension_semantics=("parallel",),
            vmem_limit_bytes=32 * 1024 * 1024),
        cost_estimate=pl.CostEstimate(
            flops=flops, transcendentals=bp * op, bytes_accessed=bytes_accessed),
    )(xp, w1p, b1p, w2p, b2p, w3p, b3p, w4p, b4p)

    return out[:B, :d_out]


def init_params(key, d_in, h1, latent, h2, d_out):
    ks = jax.random.split(key, 8)
    scale = 0.1
    w1 = scale * jax.random.normal(ks[0], (d_in, h1), jnp.float32)
    b1 = scale * jax.random.normal(ks[1], (1, h1), jnp.float32)
    w2 = scale * jax.random.normal(ks[2], (h1, latent), jnp.float32)
    b2 = scale * jax.random.normal(ks[3], (1, latent), jnp.float32)
    w3 = scale * jax.random.normal(ks[4], (latent, h2), jnp.float32)
    b3 = scale * jax.random.normal(ks[5], (1, h2), jnp.float32)
    w4 = scale * jax.random.normal(ks[6], (h2, d_out), jnp.float32)
    b4 = scale * jax.random.normal(ks[7], (1, d_out), jnp.float32)
    return (w1, b1, w2, b2, w3, b3, w4, b4)


def reference_forward(x, params):
    w1, b1, w2, b2, w3, b3, w4, b4 = params
    h1 = jnp.maximum(x @ w1 + b1, 0.0)
    z = jnp.maximum(h1 @ w2 + b2, 0.0)
    h2 = jnp.maximum(z @ w3 + b3, 0.0)
    return jax.nn.sigmoid(h2 @ w4 + b4)


if __name__ == "__main__":
    key = jax.random.PRNGKey(0)
    k_x, k_p = jax.random.split(key)

    B, D_IN, H1, LATENT, H2, D_OUT = 8, 64, 32, 16, 8, 1
    x = jax.random.normal(k_x, (B, D_IN), jnp.float32)
    params = init_params(k_p, D_IN, H1, LATENT, H2, D_OUT)

    prepared = prepare_params(params)          # pad + bf16-cast weights ONCE
    preds = model_wrapper_forward(x, prepared)
    preds = jax.block_until_ready(preds)

    ref = reference_forward(x, params)
    assert preds.shape == (B, D_OUT)
    # bf16 matmul (f32 accumulate) vs pure-f32 reference -> relaxed tolerance.
    assert jnp.allclose(preds, ref, atol=2e-2, rtol=2e-2)
    assert bool(jnp.all(jnp.isfinite(preds)))

    print("KERNEL_OK")
</pallas_src>

<mosaic_0001>
module attributes {stable_mosaic.version = 11 : i64} {
  func.func @_mlp_kernel(%arg0: i32, %arg1: memref<16x128xbf16, #tpu.memory_space<vmem>>, %arg2: memref<128x128xbf16, #tpu.memory_space<vmem>>, %arg3: memref<1x128xf32, #tpu.memory_space<vmem>>, %arg4: memref<128x128xbf16, #tpu.memory_space<vmem>>, %arg5: memref<1x128xf32, #tpu.memory_space<vmem>>, %arg6: memref<128x128xbf16, #tpu.memory_space<vmem>>, %arg7: memref<1x128xf32, #tpu.memory_space<vmem>>, %arg8: memref<128x8xbf16, #tpu.memory_space<vmem>>, %arg9: memref<1x8xf32, #tpu.memory_space<vmem>>, %arg10: memref<16x8xf32, #tpu.memory_space<vmem>>) attributes {dimension_semantics = [#tpu.dimension_semantics<parallel>], iteration_bounds = array<i64: 1>, scalar_prefetch = 0 : i64, scratch_operands = 0 : i64, tpu.core_type = #tpu.core_type<tc>, window_params = [{transform_indices = @transform_0, window_bounds = array<i64: 16, 128>}, {pipeline_mode = #tpu.pipeline_mode<synchronous>, transform_indices = @transform_1, window_bounds = array<i64: 128, 128>}, {pipeline_mode = #tpu.pipeline_mode<synchronous>, transform_indices = @transform_2, window_bounds = array<i64: 1, 128>}, {pipeline_mode = #tpu.pipeline_mode<synchronous>, transform_indices = @transform_3, window_bounds = array<i64: 128, 128>}, {pipeline_mode = #tpu.pipeline_mode<synchronous>, transform_indices = @transform_4, window_bounds = array<i64: 1, 128>}, {pipeline_mode = #tpu.pipeline_mode<synchronous>, transform_indices = @transform_5, window_bounds = array<i64: 128, 128>}, {pipeline_mode = #tpu.pipeline_mode<synchronous>, transform_indices = @transform_6, window_bounds = array<i64: 1, 128>}, {pipeline_mode = #tpu.pipeline_mode<synchronous>, transform_indices = @transform_7, window_bounds = array<i64: 128, 8>}, {pipeline_mode = #tpu.pipeline_mode<synchronous>, transform_indices = @transform_8, window_bounds = array<i64: 1, 8>}, {transform_indices = @transform_9, window_bounds = array<i64: 16, 8>}]} {
    %c0 = arith.constant 0 : index
    %c0_0 = arith.constant 0 : index
    %0 = vector.load %arg1[%c0, %c0_0] : memref<16x128xbf16, #tpu.memory_space<vmem>>, vector<16x128xbf16>
    %c0_1 = arith.constant 0 : index
    %c0_2 = arith.constant 0 : index
    %1 = vector.load %arg2[%c0_1, %c0_2] : memref<128x128xbf16, #tpu.memory_space<vmem>>, vector<128x128xbf16>
    %cst = arith.constant dense<0.000000e+00> : vector<16x128xf32>
    %2 = tpu.matmul %0, %1, %cst {dimension_numbers = #tpu.dot_dimension_numbers<[1], [0], [0], [1], [0, 0, 1, 1], [], []>} : vector<16x128xbf16>, vector<128x128xbf16>, vector<16x128xf32> -> vector<16x128xf32>
    %c0_3 = arith.constant 0 : index
    %c0_4 = arith.constant 0 : index
    %3 = vector.load %arg3[%c0_3, %c0_4] : memref<1x128xf32, #tpu.memory_space<vmem>>, vector<1x128xf32>
    %4 = vector.broadcast %3 : vector<1x128xf32> to vector<16x128xf32>
    %5 = arith.addf %2, %4 : vector<16x128xf32>
    %cst_5 = arith.constant 0.000000e+00 : f32
    %6 = vector.broadcast %cst_5 : f32 to vector<16x128xf32>
    %7 = arith.maximumf %5, %6 : vector<16x128xf32>
    %8 = arith.truncf %7 : vector<16x128xf32> to vector<16x128xbf16>
    %c0_6 = arith.constant 0 : index
    %c0_7 = arith.constant 0 : index
    %9 = vector.load %arg4[%c0_6, %c0_7] : memref<128x128xbf16, #tpu.memory_space<vmem>>, vector<128x128xbf16>
    %cst_8 = arith.constant dense<0.000000e+00> : vector<16x128xf32>
    %10 = tpu.matmul %8, %9, %cst_8 {dimension_numbers = #tpu.dot_dimension_numbers<[1], [0], [0], [1], [0, 0, 1, 1], [], []>} : vector<16x128xbf16>, vector<128x128xbf16>, vector<16x128xf32> -> vector<16x128xf32>
    %c0_9 = arith.constant 0 : index
    %c0_10 = arith.constant 0 : index
    %11 = vector.load %arg5[%c0_9, %c0_10] : memref<1x128xf32, #tpu.memory_space<vmem>>, vector<1x128xf32>
    %12 = vector.broadcast %11 : vector<1x128xf32> to vector<16x128xf32>
    %13 = arith.addf %10, %12 : vector<16x128xf32>
    %cst_11 = arith.constant 0.000000e+00 : f32
    %14 = vector.broadcast %cst_11 : f32 to vector<16x128xf32>
    %15 = arith.maximumf %13, %14 : vector<16x128xf32>
    %16 = arith.truncf %15 : vector<16x128xf32> to vector<16x128xbf16>
    %c0_12 = arith.constant 0 : index
    %c0_13 = arith.constant 0 : index
    %17 = vector.load %arg6[%c0_12, %c0_13] : memref<128x128xbf16, #tpu.memory_space<vmem>>, vector<128x128xbf16>
    %cst_14 = arith.constant dense<0.000000e+00> : vector<16x128xf32>
    %18 = tpu.matmul %16, %17, %cst_14 {dimension_numbers = #tpu.dot_dimension_numbers<[1], [0], [0], [1], [0, 0, 1, 1], [], []>} : vector<16x128xbf16>, vector<128x128xbf16>, vector<16x128xf32> -> vector<16x128xf32>
    %c0_15 = arith.constant 0 : index
    %c0_16 = arith.constant 0 : index
    %19 = vector.load %arg7[%c0_15, %c0_16] : memref<1x128xf32, #tpu.memory_space<vmem>>, vector<1x128xf32>
    %20 = vector.broadcast %19 : vector<1x128xf32> to vector<16x128xf32>
    %21 = arith.addf %18, %20 : vector<16x128xf32>
    %cst_17 = arith.constant 0.000000e+00 : f32
    %22 = vector.broadcast %cst_17 : f32 to vector<16x128xf32>
    %23 = arith.maximumf %21, %22 : vector<16x128xf32>
    %24 = arith.truncf %23 : vector<16x128xf32> to vector<16x128xbf16>
    %c0_18 = arith.constant 0 : index
    %c0_19 = arith.constant 0 : index
    %25 = vector.load %arg8[%c0_18, %c0_19] : memref<128x8xbf16, #tpu.memory_space<vmem>>, vector<128x8xbf16>
    %cst_20 = arith.constant dense<0.000000e+00> : vector<16x8xf32>
    %26 = tpu.matmul %24, %25, %cst_20 {dimension_numbers = #tpu.dot_dimension_numbers<[1], [0], [0], [1], [0, 0, 1, 1], [], []>} : vector<16x128xbf16>, vector<128x8xbf16>, vector<16x8xf32> -> vector<16x8xf32>
    %c0_21 = arith.constant 0 : index
    %c0_22 = arith.constant 0 : index
    %27 = vector.load %arg9[%c0_21, %c0_22] : memref<1x8xf32, #tpu.memory_space<vmem>>, vector<1x8xf32>
    %28 = vector.broadcast %27 : vector<1x8xf32> to vector<16x8xf32>
    %29 = arith.addf %26, %28 : vector<16x8xf32>
    %30 = arith.negf %29 : vector<16x8xf32>
    %31 = math.exp %30 : vector<16x8xf32>
    %cst_23 = arith.constant 1.000000e+00 : f32
    %32 = vector.broadcast %cst_23 : f32 to vector<16x8xf32>
    %33 = arith.addf %32, %31 : vector<16x8xf32>
    %34 = arith.divf %32, %33 : vector<16x8xf32>
    %c0_24 = arith.constant 0 : index
    %c0_25 = arith.constant 0 : index
    %35 = vector.load %arg10[%c0_24, %c0_25] : memref<16x8xf32, #tpu.memory_space<vmem>>, vector<16x8xf32>
    tpu.vector_store %arg10[%c0_24, %c0_25], %34 {strides = array<i32>} : memref<16x8xf32, #tpu.memory_space<vmem>>, vector<16x8xf32>,
    return
  }
  func.func @transform_0(%arg0: i32) -> (i32, i32) {
    %c0_i32 = arith.constant 0 : i32
    %c0_i32_0 = arith.constant 0 : i32
    return %arg0, %c0_i32 : i32, i32
  }
  func.func @transform_1(%arg0: i32) -> (i32, i32) {
    %c0_i32 = arith.constant 0 : i32
    %c0_i32_0 = arith.constant 0 : i32
    %c0_i32_1 = arith.constant 0 : i32
    return %c0_i32, %c0_i32_0 : i32, i32
  }
  func.func @transform_2(%arg0: i32) -> (i32, i32) {
    %c0_i32 = arith.constant 0 : i32
    %c0_i32_0 = arith.constant 0 : i32
    %c0_i32_1 = arith.constant 0 : i32
    return %c0_i32, %c0_i32_0 : i32, i32
  }
  func.func @transform_3(%arg0: i32) -> (i32, i32) {
    %c0_i32 = arith.constant 0 : i32
    %c0_i32_0 = arith.constant 0 : i32
    %c0_i32_1 = arith.constant 0 : i32
    return %c0_i32, %c0_i32_0 : i32, i32
  }
  func.func @transform_4(%arg0: i32) -> (i32, i32) {
    %c0_i32 = arith.constant 0 : i32
    %c0_i32_0 = arith.constant 0 : i32
    %c0_i32_1 = arith.constant 0 : i32
    return %c0_i32, %c0_i32_0 : i32, i32
  }
  func.func @transform_5(%arg0: i32) -> (i32, i32) {
    %c0_i32 = arith.constant 0 : i32
    %c0_i32_0 = arith.constant 0 : i32
    %c0_i32_1 = arith.constant 0 : i32
    return %c0_i32, %c0_i32_0 : i32, i32
  }
  func.func @transform_6(%arg0: i32) -> (i32, i32) {
    %c0_i32 = arith.constant 0 : i32
    %c0_i32_0 = arith.constant 0 : i32
    %c0_i32_1 = arith.constant 0 : i32
    return %c0_i32, %c0_i32_0 : i32, i32
  }
  func.func @transform_7(%arg0: i32) -> (i32, i32) {
    %c0_i32 = arith.constant 0 : i32
    %c0_i32_0 = arith.constant 0 : i32
    %c0_i32_1 = arith.constant 0 : i32
    return %c0_i32, %c0_i32_0 : i32, i32
  }
  func.func @transform_8(%arg0: i32) -> (i32, i32) {
    %c0_i32 = arith.constant 0 : i32
    %c0_i32_0 = arith.constant 0 : i32
    %c0_i32_1 = arith.constant 0 : i32
    return %c0_i32, %c0_i32_0 : i32, i32
  }
  func.func @transform_9(%arg0: i32) -> (i32, i32) {
    %c0_i32 = arith.constant 0 : i32
    %c0_i32_0 = arith.constant 0 : i32
    return %arg0, %c0_i32 : i32, i32
  }
}

</mosaic_0001>

<llo_original>
// kernel: tpu_custom_call.1
$region0: #{tpu_custom_call.1}
  #allocation0 [shape = 'u32[]', space=smem, size = 0x4, offset = 0x4, fixed_abs, tag = 'smem constant byte address 0x4 - core index']
  #allocation1 [shape = 'u32[144,128]{1,0:T(1,128)}', space=vmem, size = 0x12000, scoped, tag = 'internal scratch']
  %s0 = inlined_call_operand.hbm [shape: bf16[16,128], index: 0, kind: input, shape index: {}]
  %s1 = inlined_call_operand.vmem [shape: bf16[128,128], index: 1, kind: input, shape index: {}]
  %s2 = inlined_call_operand.vmem [shape: f32[1,128], index: 2, kind: input, shape index: {}]
  %s3 = inlined_call_operand.hbm [shape: bf16[128,128], index: 3, kind: input, shape index: {}]
  %s4 = inlined_call_operand.vmem [shape: f32[1,128], index: 4, kind: input, shape index: {}]
  %s5 = inlined_call_operand.hbm [shape: bf16[128,128], index: 5, kind: input, shape index: {}]
  %s6 = inlined_call_operand.vmem [shape: f32[1,128], index: 6, kind: input, shape index: {}]
  %s7 = inlined_call_operand.vmem [shape: bf16[128,8], index: 7, kind: input, shape index: {}]
  %s8 = inlined_call_operand.vmem [shape: f32[1,8], index: 8, kind: input, shape index: {}]
  %s9 = inlined_call_operand.vmem [shape: f32[16,8], index: 9, kind: output, shape index: {}]
  %s10 = sld [smem:[#allocation0]]
  $region58: #{tpu_custom_call.1} parent=0
    _
  %s12 = ssub.s32 1, %s10
  %s13 = scalar_select 0, %s12, %s10
  $region1: #{tpu_custom_call.1} parent=0
    #allocation2 [shape = 'u8[4096]{0}', space=vmem, size = 0x1000, scoped, tag = 'input window, operand 0, single buffered']
    #allocation3 [shape = 's32[1]{0}', space=sflag, size = 0x4, scoped, tag = 'scoped memory for tpu_custom_call.1']
    #allocation4 [shape = 'u8[32768]{0}', space=vmem, size = 0x8000, scoped, tag = 'input window, operand 3, single buffered']
    #allocation5 [shape = 's32[1]{0}', space=sflag, size = 0x4, scoped, tag = 'scoped memory for tpu_custom_call.1']
    #allocation6 [shape = 'u8[32768]{0}', space=vmem, size = 0x8000, scoped, tag = 'input window, operand 5, single buffered']
    %14 = vsyncpa [#allocation3], 0
    %15 = vsyncpa [#allocation5], 0
    // Predicated region
    $region2: #{tpu_custom_call.1} parent=1 // pred_check
      _
    $region3: #{tpu_custom_call.1} parent=1 // pred_check_branch
      %17 = sbr.rel (0) target = $region5
    $region4: #{tpu_custom_call.1} parent=1 // pred_region
      %s19 = ssub.s32 128, 128
      %20 = vsyncadd [#allocation3], %s19
      %s21 = sshll.u32 [#allocation2], 4
      %s22 = int_to_ptr.vmem [resolvable:$true] %s21
      %27 = dma.hbm_to_vmem [thread:$0]  %s0, 128, %s22, [#allocation3], 64, 64, 4
    $region5: #{tpu_custom_call.1} parent=1 // pred_fallthru
      _
    // Predicated region
    $region6: #{tpu_custom_call.1} parent=1 // pred_check
      _
    $region7: #{tpu_custom_call.1} parent=1 // pred_check_branch
      %29 = sbr.rel (0) target = $region9
    $region8: #{tpu_custom_call.1} parent=1 // pred_region
      _
    $region9: #{tpu_custom_call.1} parent=1 // pred_fallthru
      _
    // Predicated region
    $region10: #{tpu_custom_call.1} parent=1 // pred_check
      _
    $region11: #{tpu_custom_call.1} parent=1 // pred_check_branch
      %31 = sbr.rel (0) target = $region13
    $region12: #{tpu_custom_call.1} parent=1 // pred_region
      _
    $region13: #{tpu_custom_call.1} parent=1 // pred_fallthru
      _
    // Predicated region
    $region14: #{tpu_custom_call.1} parent=1 // pred_check
      _
    $region15: #{tpu_custom_call.1} parent=1 // pred_check_branch
      %33 = sbr.rel (0) target = $region17
    $region16: #{tpu_custom_call.1} parent=1 // pred_region
      %s35 = ssub.s32 1024, 1024
      %36 = vsyncadd [#allocation5], %s35
      %s37 = sshll.u32 [#allocation4], 4
      %s38 = int_to_ptr.vmem [resolvable:$true] %s37
      %43 = dma.hbm_to_vmem [thread:$0]  %s3, 1024, %s38, [#allocation5], 64, 64, 4
    $region17: #{tpu_custom_call.1} parent=1 // pred_fallthru
      _
    // Predicated region
    $region18: #{tpu_custom_call.1} parent=1 // pred_check
      _
    $region19: #{tpu_custom_call.1} parent=1 // pred_check_branch
      %45 = sbr.rel (0) target = $region21
    $region20: #{tpu_custom_call.1} parent=1 // pred_region
      _
    $region21: #{tpu_custom_call.1} parent=1 // pred_fallthru
      _
    // Predicated region
    $region22: #{tpu_custom_call.1} parent=1 // pred_check
      _
    $region23: #{tpu_custom_call.1} parent=1 // pred_check_branch
      %47 = sbr.rel (0) target = $region25
    $region24: #{tpu_custom_call.1} parent=1 // pred_region
      %s49 = ssub.s32 1024, 1024
      %50 = vsyncadd [#allocation5], %s49
      %s51 = sshll.u32 [#allocation6], 4
      %s52 = int_to_ptr.vmem [resolvable:$true] %s51
      %57 = dma.hbm_to_vmem [thread:$0]  %s5, 1024, %s52, [#allocation5], 64, 64, 4
    $region25: #{tpu_custom_call.1} parent=1 // pred_fallthru
      _
    // Predicated region
    $region26: #{tpu_custom_call.1} parent=1 // pred_check
      _
    $region27: #{tpu_custom_call.1} parent=1 // pred_check_branch
      %59 = sbr.rel (0) target = $region29
    $region28: #{tpu_custom_call.1} parent=1 // pred_region
      _
    $region29: #{tpu_custom_call.1} parent=1 // pred_fallthru
      _
    // Predicated region
    $region30: #{tpu_custom_call.1} parent=1 // pred_check
      _
    $region31: #{tpu_custom_call.1} parent=1 // pred_check_branch
      %61 = sbr.rel (0) target = $region33
    $region32: #{tpu_custom_call.1} parent=1 // pred_region
      _
    $region33: #{tpu_custom_call.1} parent=1 // pred_fallthru
      _
    // Predicated region
    $region34: #{tpu_custom_call.1} parent=1 // pred_check
      _
    $region35: #{tpu_custom_call.1} parent=1 // pred_check_branch
      %63 = sbr.rel (0) target = $region37
    $region36: #{tpu_custom_call.1} parent=1 // pred_region
      _
    $region37: #{tpu_custom_call.1} parent=1 // pred_fallthru
      _
    // Predicated region
    $region38: #{tpu_custom_call.1} parent=1 // pred_check
      _
    $region39: #{tpu_custom_call.1} parent=1 // pred_check_branch
      %65 = sbr.rel (0) target = $region41
    $region40: #{tpu_custom_call.1} parent=1 // pred_region
      %66 = dma.done [#allocation3], 128
    $region41: #{tpu_custom_call.1} parent=1 // pred_fallthru
      _
    // Predicated region
    $region42: #{tpu_custom_call.1} parent=1 // pred_check
      _
    $region43: #{tpu_custom_call.1} parent=1 // pred_check_branch
      %68 = sbr.rel (0) target = $region45
    $region44: #{tpu_custom_call.1} parent=1 // pred_region
      %69 = dma.done [#allocation5], 1024
    $region45: #{tpu_custom_call.1} parent=1 // pred_fallthru
      _
    // Predicated region
    $region46: #{tpu_custom_call.1} parent=1 // pred_check
      _
    $region47: #{tpu_custom_call.1} parent=1 // pred_check_branch
      %71 = sbr.rel (0) target = $region49
    $region48: #{tpu_custom_call.1} parent=1 // pred_region
      %72 = dma.done [#allocation5], 1024
    $region49: #{tpu_custom_call.1} parent=1 // pred_fallthru
      _
    %v74 = vld [vmem:[#allocation2] sm:$0xf]
    %v75 = vld [vmem:[#allocation2 + $0x4] sm:$0xf]
    %v76 = vld [vmem:[%s1] sm:$0xf]
    %v77 = vld [vmem:[%s1 + $0x4] sm:$0xf]
    %v78 = vld [vmem:[%s1 + $0x8] sm:$0xf]
    %v79 = vld [vmem:[%s1 + $0xc] sm:$0xf]
    %v80 = vld [vmem:[%s1 + $0x10] sm:$0xf]
    %v81 = vld [vmem:[%s1 + $0x14] sm:$0xf]
    %v82 = vld [vmem:[%s1 + $0x18] sm:$0xf]
    %v83 = vld [vmem:[%s1 + $0x1c] sm:$0xf]
    %v84 = vld [vmem:[%s1 + $0x20] sm:$0xf]
    %v85 = vld [vmem:[%s1 + $0x24] sm:$0xf]
    %v86 = vld [vmem:[%s1 + $0x28] sm:$0xf]
    %v87 = vld [vmem:[%s1 + $0x2c] sm:$0xf]
    %v88 = vld [vmem:[%s1 + $0x30] sm:$0xf]
    %v89 = vld [vmem:[%s1 + $0x34] sm:$0xf]
    %v90 = vld [vmem:[%s1 + $0x38] sm:$0xf]
    %v91 = vld [vmem:[%s1 + $0x3c] sm:$0xf]
    %v92 = vld [vmem:[%s2] sm:$0x1]
    %v94 = vlaneseq
    %v95 = vshrl.u32 %v94, 7
    %v96 = vsub.s32 0, %v95
    %v97 = vrot.slane %v92, %v96
    %v101 = vunpack.c.l.b16 %v74
    %v102 = vunpack.c.l.b16 %v75
    %v103 = vpack.c.b16 %v102, %v101
    %v121 = vunpack.c.l.b16 %v76
    %v122 = vunpack.c.l.b16 %v77
    %v123 = vunpack.c.l.b16 %v78
    %v124 = vunpack.c.l.b16 %v79
    %v125 = vunpack.c.l.b16 %v80
    %v126 = vunpack.c.l.b16 %v81
    %v127 = vunpack.c.l.b16 %v82
    %v128 = vunpack.c.l.b16 %v83
    %v129 = vunpack.c.l.b16 %v84
    %v130 = vunpack.c.l.b16 %v85
    %v131 = vunpack.c.l.b16 %v86
    %v132 = vunpack.c.l.b16 %v87
    %v133 = vunpack.c.l.b16 %v88
    %v134 = vunpack.c.l.b16 %v89
    %v135 = vunpack.c.l.b16 %v90
    %v136 = vunpack.c.l.b16 %v91
    %v137 = vpack.c.b16 %v122, %v121
    %v138 = vpack.c.b16 %v124, %v123
    %v139 = vpack.c.b16 %v126, %v125
    %v140 = vpack.c.b16 %v128, %v127
    %v141 = vpack.c.b16 %v130, %v129
    %v142 = vpack.c.b16 %v132, %v131
    %v143 = vpack.c.b16 %v134, %v133
    %v144 = vpack.c.b16 %v136, %v135
    %153 = vmatprep.subr.bf16.mxu0 0
    %154 = vmatpush1.bf16.msra.mxu0 %v144
    %155 = vmatprep.subr.bf16.mxu0 0
    %156 = vmatpush1.bf16.msra.mxu0 %v143
    %157 = vmatprep.subr.bf16.mxu0 0
    %158 = vmatpush1.bf16.msra.mxu0 %v142
    %159 = vmatprep.subr.bf16.mxu0 0
    %160 = vmatpush1.bf16.msra.mxu0 %v141
    %161 = vmatprep.subr.bf16.mxu0 0
    %162 = vmatpush1.bf16.msra.mxu0 %v140
    %163 = vmatprep.subr.bf16.mxu0 0
    %164 = vmatpush1.bf16.msra.mxu0 %v139
    %165 = vmatprep.subr.bf16.mxu0 0
    %166 = vmatpush1.bf16.msra.mxu0 %v138
    %167 = vmatprep.subr.bf16.mxu0 0
    %168 = vmatpush1.bf16.msra.mxu0 %v137
    %169 = vmatprep.subr.bf16.mxu0 0
    %170 = vmatpush2.bf16.msra.mxu0 0
    %171 = vmatprep.subr.bf16.mxu0 0
    %172 = vmatpush2.bf16.msra.mxu0 0
    %173 = vmatprep.subr.bf16.mxu0 0
    %174 = vmatpush2.bf16.msra.mxu0 0
    %175 = vmatprep.subr.bf16.mxu0 0
    %176 = vmatpush2.bf16.msra.mxu0 0
    %177 = vmatprep.subr.bf16.mxu0 0
    %178 = vmatpush2.bf16.msra.mxu0 0
    %179 = vmatprep.subr.bf16.mxu0 0
    %180 = vmatpush2.bf16.msra.mxu0 0
    %181 = vmatprep.subr.bf16.mxu0 0
    %182 = vmatpush2.bf16.msra.mxu0 0
    %183 = vmatprep.subr.bf16.mxu0 0
    %184 = vmatpush2.bf16.msra.mxu0 0
    %185 = vmatprep.mubr.bf16.mxu0 0
    %186 = vmatmul.mubr.bf16.gmra.mxu0 %v103
    %v187 = vpop.f32.mrf.mxu0
    %v188 = vadd.f32 %v97, %v187
    %v189 = vpop.f32.mrf.mxu0
    %v190 = vpop.f32.mrf.mxu0
    %v191 = vadd.f32 %v97, %v190
    %v192 = vpop.f32.mrf.mxu0
    %193 = vdwg.mxu0
    %v194 = vmax.f32 %v188, 0.0
    %v195 = vmax.f32 %v191, 0.0
    %v196 = vpack.c.bf16 %v195, %v194
    %v197 = vld [vmem:[#allocation4] sm:$0xf]
    %v198 = vld [vmem:[#allocation4 + $0x4] sm:$0xf]
    %v199 = vld [vmem:[#allocation4 + $0x8] sm:$0xf]
    %v200 = vld [vmem:[#allocation4 + $0xc] sm:$0xf]
    %v201 = vld [vmem:[#allocation4 + $0x10] sm:$0xf]
    %v202 = vld [vmem:[#allocation4 + $0x14] sm:$0xf]
    %v203 = vld [vmem:[#allocation4 + $0x18] sm:$0xf]
    %v204 = vld [vmem:[#allocation4 + $0x1c] sm:$0xf]
    %v205 = vld [vmem:[#allocation4 + $0x20] sm:$0xf]
    %v206 = vld [vmem:[#allocation4 + $0x24] sm:$0xf]
    %v207 = vld [vmem:[#allocation4 + $0x28] sm:$0xf]
    %v208 = vld [vmem:[#allocation4 + $0x2c] sm:$0xf]
    %v209 = vld [vmem:[#allocation4 + $0x30] sm:$0xf]
    %v210 = vld [vmem:[#allocation4 + $0x34] sm:$0xf]
    %v211 = vld [vmem:[#allocation4 + $0x38] sm:$0xf]
    %v212 = vld [vmem:[#allocation4 + $0x3c] sm:$0xf]
    %v213 = vld [vmem:[%s4] sm:$0x1]
    %v215 = vlaneseq
    %v216 = vshrl.u32 %v215, 7
    %v217 = vsub.s32 0, %v216
    %v218 = vrot.slane %v213, %v217
    %v236 = vunpack.c.l.b16 %v197
    %v237 = vunpack.c.l.b16 %v198
    %v238 = vunpack.c.l.b16 %v199
    %v239 = vunpack.c.l.b16 %v200
    %v240 = vunpack.c.l.b16 %v201
    %v241 = vunpack.c.l.b16 %v202
    %v242 = vunpack.c.l.b16 %v203
    %v243 = vunpack.c.l.b16 %v204
    %v244 = vunpack.c.l.b16 %v205
    %v245 = vunpack.c.l.b16 %v206
    %v246 = vunpack.c.l.b16 %v207
    %v247 = vunpack.c.l.b16 %v208
    %v248 = vunpack.c.l.b16 %v209
    %v249 = vunpack.c.l.b16 %v210
    %v250 = vunpack.c.l.b16 %v211
    %v251 = vunpack.c.l.b16 %v212
    %v252 = vpack.c.b16 %v237, %v236
    %v253 = vpack.c.b16 %v239, %v238
    %v254 = vpack.c.b16 %v241, %v240
    %v255 = vpack.c.b16 %v243, %v242
    %v256 = vpack.c.b16 %v245, %v244
    %v257 = vpack.c.b16 %v247, %v246
    %v258 = vpack.c.b16 %v249, %v248
    %v259 = vpack.c.b16 %v251, %v250
    %268 = vmatprep.subr.bf16.mxu0 0
    %269 = vmatpush1.bf16.msra.mxu0 %v259
    %270 = vmatprep.subr.bf16.mxu0 0
    %271 = vmatpush1.bf16.msra.mxu0 %v258
    %272 = vmatprep.subr.bf16.mxu0 0
    %273 = vmatpush1.bf16.msra.mxu0 %v257
    %274 = vmatprep.subr.bf16.mxu0 0
    %275 = vmatpush1.bf16.msra.mxu0 %v256
    %276 = vmatprep.subr.bf16.mxu0 0
    %277 = vmatpush1.bf16.msra.mxu0 %v255
    %278 = vmatprep.subr.bf16.mxu0 0
    %279 = vmatpush1.bf16.msra.mxu0 %v254
    %280 = vmatprep.subr.bf16.mxu0 0
    %281 = vmatpush1.bf16.msra.mxu0 %v253
    %282 = vmatprep.subr.bf16.mxu0 0
    %283 = vmatpush1.bf16.msra.mxu0 %v252
    %284 = vmatprep.subr.bf16.mxu0 0
    %285 = vmatpush2.bf16.msra.mxu0 0
    %286 = vmatprep.subr.bf16.mxu0 0
    %287 = vmatpush2.bf16.msra.mxu0 0
    %288 = vmatprep.subr.bf16.mxu0 0
    %289 = vmatpush2.bf16.msra.mxu0 0
    %290 = vmatprep.subr.bf16.mxu0 0
    %291 = vmatpush2.bf16.msra.mxu0 0
    %292 = vmatprep.subr.bf16.mxu0 0
    %293 = vmatpush2.bf16.msra.mxu0 0
    %294 = vmatprep.subr.bf16.mxu0 0
    %295 = vmatpush2.bf16.msra.mxu0 0
    %296 = vmatprep.subr.bf16.mxu0 0
    %297 = vmatpush2.bf16.msra.mxu0 0
    %298 = vmatprep.subr.bf16.mxu0 0
    %299 = vmatpush2.bf16.msra.mxu0 0
    %300 = vmatprep.mubr.bf16.mxu0 0
    %301 = vmatmul.mubr.bf16.gmra.mxu0 %v196
    %v302 = vpop.f32.mrf.mxu0
    %v303 = vadd.f32 %v218, %v302
    %v304 = vpop.f32.mrf.mxu0
    %v305 = vpop.f32.mrf.mxu0
    %v306 = vadd.f32 %v218, %v305
    %v307 = vpop.f32.mrf.mxu0
    %308 = vdwg.mxu0
    %v309 = vmax.f32 %v303, 0.0
    %v310 = vmax.f32 %v306, 0.0
    %v311 = vpack.c.bf16 %v310, %v309
    %v312 = vld [vmem:[#allocation6] sm:$0xf]
    %v313 = vld [vmem:[#allocation6 + $0x4] sm:$0xf]
    %v314 = vld [vmem:[#allocation6 + $0x8] sm:$0xf]
    %v315 = vld [vmem:[#allocation6 + $0xc] sm:$0xf]
    %v316 = vld [vmem:[#allocation6 + $0x10] sm:$0xf]
    %v317 = vld [vmem:[#allocation6 + $0x14] sm:$0xf]
    %v318 = vld [vmem:[#allocation6 + $0x18] sm:$0xf]
    %v319 = vld [vmem:[#allocation6 + $0x1c] sm:$0xf]
    %v320 = vld [vmem:[#allocation6 + $0x20] sm:$0xf]
    %v321 = vld [vmem:[#allocation6 + $0x24] sm:$0xf]
    %v322 = vld [vmem:[#allocation6 + $0x28] sm:$0xf]
    %v323 = vld [vmem:[#allocation6 + $0x2c] sm:$0xf]
    %v324 = vld [vmem:[#allocation6 + $0x30] sm:$0xf]
    %v325 = vld [vmem:[#allocation6 + $0x34] sm:$0xf]
    %v326 = vld [vmem:[#allocation6 + $0x38] sm:$0xf]
    %v327 = vld [vmem:[#allocation6 + $0x3c] sm:$0xf]
    %v328 = vld [vmem:[%s6] sm:$0x1]
    %v330 = vlaneseq
    %v331 = vshrl.u32 %v330, 7
    %v332 = vsub.s32 0, %v331
    %v333 = vrot.slane %v328, %v332
    %v351 = vunpack.c.l.b16 %v312
    %v352 = vunpack.c.l.b16 %v313
    %v353 = vunpack.c.l.b16 %v314
    %v354 = vunpack.c.l.b16 %v315
    %v355 = vunpack.c.l.b16 %v316
    %v356 = vunpack.c.l.b16 %v317
    %v357 = vunpack.c.l.b16 %v318
    %v358 = vunpack.c.l.b16 %v319
    %v359 = vunpack.c.l.b16 %v320
    %v360 = vunpack.c.l.b16 %v321
    %v361 = vunpack.c.l.b16 %v322
    %v362 = vunpack.c.l.b16 %v323
    %v363 = vunpack.c.l.b16 %v324
    %v364 = vunpack.c.l.b16 %v325
    %v365 = vunpack.c.l.b16 %v326
    %v366 = vunpack.c.l.b16 %v327
    %v367 = vpack.c.b16 %v352, %v351
    %v368 = vpack.c.b16 %v354, %v353
    %v369 = vpack.c.b16 %v356, %v355
    %v370 = vpack.c.b16 %v358, %v357
    %v371 = vpack.c.b16 %v360, %v359
    %v372 = vpack.c.b16 %v362, %v361
    %v373 = vpack.c.b16 %v364, %v363
    %v374 = vpack.c.b16 %v366, %v365
    %383 = vmatprep.subr.bf16.mxu0 0
    %384 = vmatpush1.bf16.msra.mxu0 %v374
    %385 = vmatprep.subr.bf16.mxu0 0
    %386 = vmatpush1.bf16.msra.mxu0 %v373
    %387 = vmatprep.subr.bf16.mxu0 0
    %388 = vmatpush1.bf16.msra.mxu0 %v372
    %389 = vmatprep.subr.bf16.mxu0 0
    %390 = vmatpush1.bf16.msra.mxu0 %v371
    %391 = vmatprep.subr.bf16.mxu0 0
    %392 = vmatpush1.bf16.msra.mxu0 %v370
    %393 = vmatprep.subr.bf16.mxu0 0
    %394 = vmatpush1.bf16.msra.mxu0 %v369
    %395 = vmatprep.subr.bf16.mxu0 0
    %396 = vmatpush1.bf16.msra.mxu0 %v368
    %397 = vmatprep.subr.bf16.mxu0 0
    %398 = vmatpush1.bf16.msra.mxu0 %v367
    %399 = vmatprep.subr.bf16.mxu0 0
    %400 = vmatpush2.bf16.msra.mxu0 0
    %401 = vmatprep.subr.bf16.mxu0 0
    %402 = vmatpush2.bf16.msra.mxu0 0
    %403 = vmatprep.subr.bf16.mxu0 0
    %404 = vmatpush2.bf16.msra.mxu0 0
    %405 = vmatprep.subr.bf16.mxu0 0
    %406 = vmatpush2.bf16.msra.mxu0 0
    %407 = vmatprep.subr.bf16.mxu0 0
    %408 = vmatpush2.bf16.msra.mxu0 0
    %409 = vmatprep.subr.bf16.mxu0 0
    %410 = vmatpush2.bf16.msra.mxu0 0
    %411 = vmatprep.subr.bf16.mxu0 0
    %412 = vmatpush2.bf16.msra.mxu0 0
    %413 = vmatprep.subr.bf16.mxu0 0
    %414 = vmatpush2.bf16.msra.mxu0 0
    %415 = vmatprep.mubr.bf16.mxu0 0
    %416 = vmatmul.mubr.bf16.gmra.mxu0 %v311
    %v417 = vpop.f32.mrf.mxu0
    %v418 = vadd.f32 %v333, %v417
    %v419 = vpop.f32.mrf.mxu0
    %v420 = vpop.f32.mrf.mxu0
    %v421 = vadd.f32 %v333, %v420
    %v422 = vpop.f32.mrf.mxu0
    %423 = vdwg.mxu0
    %v424 = vmax.f32 %v418, 0.0
    %v425 = vmax.f32 %v421, 0.0
    %v426 = vpack.c.bf16 %v425, %v424
    %v427 = vld [vmem:[%s7] sm:$0xf]
    %v428 = vld [vmem:[%s7 + $0x4] sm:$0xf]
    %v429 = vld [vmem:[%s7 + $0x8] sm:$0xf]
    %v430 = vld [vmem:[%s7 + $0xc] sm:$0xf]
    %v431 = vld [vmem:[%s7 + $0x10] sm:$0xf]
    %v432 = vld [vmem:[%s7 + $0x14] sm:$0xf]
    %v433 = vld [vmem:[%s7 + $0x18] sm:$0xf]
    %v434 = vld [vmem:[%s7 + $0x1c] sm:$0xf]
    %v435 = vld [vmem:[%s7 + $0x20] sm:$0xf]
    %v436 = vld [vmem:[%s7 + $0x24] sm:$0xf]
    %v437 = vld [vmem:[%s7 + $0x28] sm:$0xf]
    %v438 = vld [vmem:[%s7 + $0x2c] sm:$0xf]
    %v439 = vld [vmem:[%s7 + $0x30] sm:$0xf]
    %v440 = vld [vmem:[%s7 + $0x34] sm:$0xf]
    %v441 = vld [vmem:[%s7 + $0x38] sm:$0xf]
    %v442 = vld [vmem:[%s7 + $0x3c] sm:$0xf]
    %v443 = vld [vmem:[%s8] sm:$0x1]
    %v445 = vlaneseq
    %v446 = vshrl.u32 %v445, 7
    %v447 = vsub.s32 0, %v446
    %v448 = vrot.slane %v443, %v447
    %v466 = vunpack.c.l.b16 %v427
    %v467 = vunpack.c.l.b16 %v428
    %v468 = vunpack.c.l.b16 %v429
    %v469 = vunpack.c.l.b16 %v430
    %v470 = vunpack.c.l.b16 %v431
    %v471 = vunpack.c.l.b16 %v432
    %v472 = vunpack.c.l.b16 %v433
    %v473 = vunpack.c.l.b16 %v434
    %v474 = vunpack.c.l.b16 %v435
    %v475 = vunpack.c.l.b16 %v436
    %v476 = vunpack.c.l.b16 %v437
    %v477 = vunpack.c.l.b16 %v438
    %v478 = vunpack.c.l.b16 %v439
    %v479 = vunpack.c.l.b16 %v440
    %v480 = vunpack.c.l.b16 %v441
    %v481 = vunpack.c.l.b16 %v442
    %v482 = vpack.c.b16 %v467, %v466
    %v483 = vpack.c.b16 %v469, %v468
    %v484 = vpack.c.b16 %v471, %v470
    %v485 = vpack.c.b16 %v473, %v472
    %v486 = vpack.c.b16 %v475, %v474
    %v487 = vpack.c.b16 %v477, %v476
    %v488 = vpack.c.b16 %v479, %v478
    %v489 = vpack.c.b16 %v481, %v480
    %498 = vmatprep.subr.bf16.mxu0 0
    %499 = vmatpush1.bf16.msra.mxu0 %v489
    %500 = vmatprep.subr.bf16.mxu0 0
    %501 = vmatpush1.bf16.msra.mxu0 %v488
    %502 = vmatprep.subr.bf16.mxu0 0
    %503 = vmatpush1.bf16.msra.mxu0 %v487
    %504 = vmatprep.subr.bf16.mxu0 0
    %505 = vmatpush1.bf16.msra.mxu0 %v486
    %506 = vmatprep.subr.bf16.mxu0 0
    %507 = vmatpush1.bf16.msra.mxu0 %v485
    %508 = vmatprep.subr.bf16.mxu0 0
    %509 = vmatpush1.bf16.msra.mxu0 %v484
    %510 = vmatprep.subr.bf16.mxu0 0
    %511 = vmatpush1.bf16.msra.mxu0 %v483
    %512 = vmatprep.subr.bf16.mxu0 0
    %513 = vmatpush1.bf16.msra.mxu0 %v482
    %514 = vmatprep.subr.bf16.mxu0 0
    %515 = vmatpush2.bf16.msra.mxu0 0
    %516 = vmatprep.subr.bf16.mxu0 0
    %517 = vmatpush2.bf16.msra.mxu0 0
    %518 = vmatprep.subr.bf16.mxu0 0
    %519 = vmatpush2.bf16.msra.mxu0 0
    %520 = vmatprep.subr.bf16.mxu0 0
    %521 = vmatpush2.bf16.msra.mxu0 0
    %522 = vmatprep.subr.bf16.mxu0 0
    %523 = vmatpush2.bf16.msra.mxu0 0
    %524 = vmatprep.subr.bf16.mxu0 0
    %525 = vmatpush2.bf16.msra.mxu0 0
    %526 = vmatprep.subr.bf16.mxu0 0
    %527 = vmatpush2.bf16.msra.mxu0 0
    %528 = vmatprep.subr.bf16.mxu0 0
    %529 = vmatpush2.bf16.msra.mxu0 0
    %530 = vmatprep.mubr.bf16.mxu0 0
    %531 = vmatmul.mubr.bf16.gmra.mxu0 %v426
    %v532 = vpop.f32.mrf.mxu0
    %v533 = vadd.f32 %v448, %v532
    %v534 = vpop.f32.mrf.mxu0
    %v535 = vpop.f32.mrf.mxu0
    %v536 = vadd.f32 %v448, %v535
    %v537 = vpop.f32.mrf.mxu0
    %538 = vdwg.mxu0
    %v539 = vxor.u32 %v533, 2147483648
    %v540 = vxor.u32 %v536, 2147483648
    %v541 = vmul.f32 %v539, 1.442695
    %v542 = vpow.pop %v541
    %v543 = vmul.f32 %v540, 1.442695
    %v544 = vpow.pop %v543
    %v545 = vadd.f32 %v542, 1.0
    %v546 = vadd.f32 %v544, 1.0
    %v547 = vrcp.pop %v545
    %v548 = vmul.f32 1.0, %v547
    %v549 = vrcp.pop %v546
    %v550 = vmul.f32 1.0, %v549
    %vm551 = vcmask 64512
    %552 = vst.msk [vmem:[%s9] sm:$0xff] %vm551, %v548
    %553 = vst.msk [vmem:[%s9 + $0x8] sm:$0xff] %vm551, %v550
    // Predicated region
    $region50: #{tpu_custom_call.1} parent=1 // pred_check
      _
    $region51: #{tpu_custom_call.1} parent=1 // pred_check_branch
      %555 = sbr.rel (0) target = $region53
    $region52: #{tpu_custom_call.1} parent=1 // pred_region
      _
    $region53: #{tpu_custom_call.1} parent=1 // pred_fallthru
      _
    // Predicated region
    $region54: #{tpu_custom_call.1} parent=1 // pred_check
      _
    $region55: #{tpu_custom_call.1} parent=1 // pred_check_branch
      %557 = sbr.rel (0) target = $region57
    $region56: #{tpu_custom_call.1} parent=1 // pred_region
      _
    $region57: #{tpu_custom_call.1} parent=1 // pred_fallthru
      _
    %558 = vsyncpa [#allocation3], 1
    %559 = vsyncpa [#allocation5], 1

</llo_original>
